<compile_context>
chip_gen: v7x
topology: tpu7x:2x2x1
jax: 0.10.0
libtpu: 0.0.40
codegen_flags: <defaults>
</compile_context>

<pallas_src>
import functools

import jax
import jax.numpy as jnp
from jax.experimental import pallas as pl
from jax.experimental.pallas import tpu as pltpu

LANES = 128


def _seq_loss_kernel(n_pred, n_rows, mask_ref, *refs):
    nf_refs = refs[:n_pred]
    sums_ref = refs[n_pred]
    cnts_ref = refs[n_pred + 1]

    t = pl.program_id(0)
    tr = mask_ref.shape[0]

    # Row-validity mask for the (possibly partial) last grid tile.
    row = jax.lax.broadcasted_iota(jnp.int32, (tr, LANES), 0)
    row_ok = (t * tr + row) < n_rows
    # Wrapper-computed validity mask; zeroed on out-of-range rows (where, not
    # multiply: OOB garbage could be NaN).
    mask = jnp.where(row_ok, mask_ref[...], 0.0)

    # Static loop over predictions: mask / row_ok are computed once per tile.
    for j in range(n_pred):
        loss = nf_refs[j][...].astype(jnp.float32)      # cast after DMA
        loss = jnp.where(row_ok, loss, 0.0)             # kill OOB garbage (NaN-safe)
        # |x| < inf  <=>  ~isnan(x) & ~isinf(x)  (single-compare finiteness test)
        fm = jnp.where(jnp.abs(loss) < jnp.inf, mask, 0.0)
        # NOTE: multiply (not where) keeps torch's `final_mask * loss_i`
        # semantics: an in-range NaN/Inf loss element still yields NaN overall.
        sums_ref[0, j, :] = jnp.sum(fm * loss, axis=0)  # sublane reduce -> (128,)
        cnts_ref[0, j, :] = jnp.sum(fm, axis=0)


def sequence_loss(outputs, inputs, gamma: float, max_flow: float):
    """Pallas implementation of SequenceLoss.forward."""
    nf_list = outputs["nf_preds"]
    n_pred = len(outputs["flow_preds"])
    assert len(nf_list) >= n_pred

    flow_gt = inputs["flows"][:, 0]        # (B, 2, H, W)
    valid = inputs["valids"][:, 0]         # (B, 1, H, W)
    B, _, H, W = flow_gt.shape
    P = B * H * W

    # Fused wrapper-side mask: reads flow/valid once, writes a single slab.
    u = flow_gt[:, 0].astype(jnp.float32)
    v = flow_gt[:, 1].astype(jnp.float32)
    mag2 = u * u + v * v
    mask = ((valid[:, 0].astype(jnp.float32) >= 0.5)
            & (mag2 < jnp.float32(float(max_flow) * float(max_flow))))
    mask = mask.astype(jnp.float32)        # (B, H, W)

    n_rows = -(-P // LANES)                # rows of the (n_rows, 128) slab
    pad = n_rows * LANES - P

    def slab(x):
        x = x.reshape(-1)
        if pad:
            # TODO(synk): ragged pixel counts (P % 128 != 0) force a pad copy per
            # array; real flow resolutions are lane-aligned so this path is cold.
            x = jnp.pad(x, (0, pad))
        return x.reshape(n_rows, LANES)

    mask2d = slab(mask)                                    # (n_rows, 128) f32
    nf_slabs = [slab(p) for p in nf_list[:n_pred]]         # native dtype, no stack

    # Row-tile size from a VMEM budget (inputs are double-buffered).
    VMEM_BUDGET = 20 * 1024 * 1024
    bytes_per_row = (n_pred + 1) * 2 * LANES * 4
    tr_cap = max(8, min(2048, (VMEM_BUDGET // bytes_per_row) // 8 * 8))
    if n_rows <= tr_cap:
        TR, num_tiles = n_rows, 1          # full-dim block (no 8-divisibility needed)
    else:
        TR = tr_cap                        # multiple of 8; last tile handled by row_ok
        num_tiles = -(-n_rows // TR)

    kernel = functools.partial(_seq_loss_kernel, n_pred, n_rows)
    tile_spec = pl.BlockSpec((TR, LANES), lambda t: (t, 0))
    out_spec = pl.BlockSpec((1, n_pred, LANES), lambda t: (t, 0, 0))

    psums, pcnts = pl.pallas_call(
        kernel,
        out_shape=(jax.ShapeDtypeStruct((num_tiles, n_pred, LANES), jnp.float32),
                   jax.ShapeDtypeStruct((num_tiles, n_pred, LANES), jnp.float32)),
        grid=(num_tiles,),
        in_specs=[tile_spec] * (n_pred + 1),
        out_specs=(out_spec, out_spec),
        compiler_params=pltpu.CompilerParams(
            dimension_semantics=("parallel",),        # tiles carry no state -> v7x 2-TC
            vmem_limit_bytes=32 * 1024 * 1024),
    )(mask2d, *nf_slabs)

    # gamma-weighted combine outside the kernel (exact torch semantics;
    # a zero mask count intentionally produces NaN, like the reference).
    sums = jnp.sum(psums, axis=(0, 2))     # (n_pred,)
    cnts = jnp.sum(pcnts, axis=(0, 2))
    exps = (n_pred - 1 - jnp.arange(n_pred)).astype(jnp.float32)
    w = jnp.power(jnp.float32(gamma), exps)
    return jnp.sum(w * (sums / cnts))


def sequence_loss_ref(outputs, inputs, gamma: float, max_flow: float):
    """Pure-JAX reference mirroring the PyTorch module exactly."""
    flow_gt = inputs["flows"][:, 0]
    valid = inputs["valids"][:, 0]
    n_pred = len(outputs["flow_preds"])
    mag = jnp.sqrt(jnp.sum(flow_gt ** 2, axis=1, keepdims=True))
    valid = (valid >= 0.5) & (mag < max_flow)
    loss = jnp.float32(0.0)
    for i in range(n_pred):
        w = gamma ** (n_pred - i - 1)
        li = outputs["nf_preds"][i]
        fm = (~jnp.isnan(li)) & (~jnp.isinf(li)) & valid
        loss = loss + w * (jnp.sum(fm * li) / jnp.sum(fm))
    return loss


if __name__ == "__main__":
    # SequenceLoss(gamma=0.8, max_flow=400.0) — deterministic synthetic inputs.
    gamma, max_flow = 0.8, 400.0
    B, H, W, N = 2, 16, 16, 6

    key = jax.random.PRNGKey(0)
    k_flow, k_valid, k_nf, k_fp = jax.random.split(key, 4)

    flows = jax.random.normal(k_flow, (B, 1, 2, H, W), jnp.float32) * 300.0
    valids = jax.random.uniform(k_valid, (B, 1, 1, H, W), jnp.float32)
    nf_preds = list(jax.random.normal(k_nf, (N, B, 1, H, W), jnp.float32))
    # flow_preds only contribute their count (n_predictions) to the loss.
    flow_preds = list(jax.random.normal(k_fp, (N, B, 2, H, W), jnp.float32))

    outputs = {"flow_preds": flow_preds, "nf_preds": nf_preds}
    inputs = {"flows": flows, "valids": valids}

    loss = sequence_loss(outputs, inputs, gamma, max_flow)
    loss = jax.block_until_ready(loss)

    ref = sequence_loss_ref(outputs, inputs, gamma, max_flow)
    assert jnp.allclose(loss, ref, rtol=1e-5, atol=1e-5), (loss, ref)

    print("KERNEL_OK")
</pallas_src>

<mosaic_0001>
module attributes {stable_mosaic.version = 11 : i64} {
  func.func @_seq_loss_kernel(%arg0: i32, %arg1: memref<4x128xf32, #tpu.memory_space<vmem>>, %arg2: memref<4x128xf32, #tpu.memory_space<vmem>>, %arg3: memref<4x128xf32, #tpu.memory_space<vmem>>, %arg4: memref<4x128xf32, #tpu.memory_space<vmem>>, %arg5: memref<4x128xf32, #tpu.memory_space<vmem>>, %arg6: memref<4x128xf32, #tpu.memory_space<vmem>>, %arg7: memref<4x128xf32, #tpu.memory_space<vmem>>, %arg8: memref<1x6x128xf32, #tpu.memory_space<vmem>>, %arg9: memref<1x6x128xf32, #tpu.memory_space<vmem>>) attributes {dimension_semantics = [#tpu.dimension_semantics<parallel>], iteration_bounds = array<i64: 1>, scalar_prefetch = 0 : i64, scratch_operands = 0 : i64, tpu.core_type = #tpu.core_type<tc>, window_params = [{transform_indices = @transform_0, window_bounds = array<i64: 4, 128>}, {transform_indices = @transform_1, window_bounds = array<i64: 4, 128>}, {transform_indices = @transform_2, window_bounds = array<i64: 4, 128>}, {transform_indices = @transform_3, window_bounds = array<i64: 4, 128>}, {transform_indices = @transform_4, window_bounds = array<i64: 4, 128>}, {transform_indices = @transform_5, window_bounds = array<i64: 4, 128>}, {transform_indices = @transform_6, window_bounds = array<i64: 4, 128>}, {transform_indices = @transform_7, window_bounds = array<i64: 1, 6, 128>}, {transform_indices = @transform_8, window_bounds = array<i64: 1, 6, 128>}]} {
    %0 = tpu.iota {dimensions = array<i32: 0>} : vector<4x128xi32>
    %c4_i32 = arith.constant 4 : i32
    %1 = arith.muli %arg0, %c4_i32 : i32
    %2 = vector.broadcast %1 : i32 to vector<4x128xi32>
    %3 = arith.addi %2, %0 : vector<4x128xi32>
    %c4_i32_0 = arith.constant 4 : i32
    %4 = vector.broadcast %c4_i32_0 : i32 to vector<4x128xi32>
    %5 = arith.cmpi slt, %3, %4 : vector<4x128xi32>
    %c0 = arith.constant 0 : index
    %c0_1 = arith.constant 0 : index
    %6 = vector.load %arg1[%c0, %c0_1] : memref<4x128xf32, #tpu.memory_space<vmem>>, vector<4x128xf32>
    %cst = arith.constant 0.000000e+00 : f32
    %7 = vector.broadcast %cst : f32 to vector<4x128xf32>
    %8 = arith.select %5, %6, %7 : vector<4x128xi1>, vector<4x128xf32>
    %c0_2 = arith.constant 0 : index
    %c0_3 = arith.constant 0 : index
    %9 = vector.load %arg2[%c0_2, %c0_3] : memref<4x128xf32, #tpu.memory_space<vmem>>, vector<4x128xf32>
    %cst_4 = arith.constant 0.000000e+00 : f32
    %10 = vector.broadcast %cst_4 : f32 to vector<4x128xf32>
    %11 = arith.select %5, %9, %10 : vector<4x128xi1>, vector<4x128xf32>
    %12 = math.absf %11 : vector<4x128xf32>
    %cst_5 = arith.constant 0x7F800000 : f32
    %13 = vector.broadcast %cst_5 : f32 to vector<4x128xf32>
    %14 = arith.cmpf olt, %12, %13 : vector<4x128xf32>
    %cst_6 = arith.constant 0.000000e+00 : f32
    %15 = vector.broadcast %cst_6 : f32 to vector<4x128xf32>
    %16 = arith.select %14, %8, %15 : vector<4x128xi1>, vector<4x128xf32>
    %17 = arith.mulf %16, %11 : vector<4x128xf32>
    %cst_7 = arith.constant dense<0.000000e+00> : vector<128xf32>
    %18 = vector.multi_reduction <add>, %17, %cst_7 [0] : vector<4x128xf32> to vector<128xf32>
    %c0_8 = arith.constant 0 : index
    %c0_9 = arith.constant 0 : index
    %c0_10 = arith.constant 0 : index
    %19 = vector.load %arg8[%c0_8, %c0_9, %c0_10] : memref<1x6x128xf32, #tpu.memory_space<vmem>>, vector<1x1x128xf32>
    %20 = vector.shape_cast %19 : vector<1x1x128xf32> to vector<128xf32>
    %21 = vector.shape_cast %18 : vector<128xf32> to vector<1x1x128xf32>
    tpu.vector_store %arg8[%c0_8, %c0_9, %c0_10], %21 {strides = array<i32>} : memref<1x6x128xf32, #tpu.memory_space<vmem>>, vector<1x1x128xf32>,
    %cst_11 = arith.constant dense<0.000000e+00> : vector<128xf32>
    %22 = vector.multi_reduction <add>, %16, %cst_11 [0] : vector<4x128xf32> to vector<128xf32>
    %c0_12 = arith.constant 0 : index
    %c0_13 = arith.constant 0 : index
    %c0_14 = arith.constant 0 : index
    %23 = vector.load %arg9[%c0_12, %c0_13, %c0_14] : memref<1x6x128xf32, #tpu.memory_space<vmem>>, vector<1x1x128xf32>
    %24 = vector.shape_cast %23 : vector<1x1x128xf32> to vector<128xf32>
    %25 = vector.shape_cast %22 : vector<128xf32> to vector<1x1x128xf32>
    tpu.vector_store %arg9[%c0_12, %c0_13, %c0_14], %25 {strides = array<i32>} : memref<1x6x128xf32, #tpu.memory_space<vmem>>, vector<1x1x128xf32>,
    %c0_15 = arith.constant 0 : index
    %c0_16 = arith.constant 0 : index
    %26 = vector.load %arg3[%c0_15, %c0_16] : memref<4x128xf32, #tpu.memory_space<vmem>>, vector<4x128xf32>
    %cst_17 = arith.constant 0.000000e+00 : f32
    %27 = vector.broadcast %cst_17 : f32 to vector<4x128xf32>
    %28 = arith.select %5, %26, %27 : vector<4x128xi1>, vector<4x128xf32>
    %29 = math.absf %28 : vector<4x128xf32>
    %cst_18 = arith.constant 0x7F800000 : f32
    %30 = vector.broadcast %cst_18 : f32 to vector<4x128xf32>
    %31 = arith.cmpf olt, %29, %30 : vector<4x128xf32>
    %cst_19 = arith.constant 0.000000e+00 : f32
    %32 = vector.broadcast %cst_19 : f32 to vector<4x128xf32>
    %33 = arith.select %31, %8, %32 : vector<4x128xi1>, vector<4x128xf32>
    %34 = arith.mulf %33, %28 : vector<4x128xf32>
    %cst_20 = arith.constant dense<0.000000e+00> : vector<128xf32>
    %35 = vector.multi_reduction <add>, %34, %cst_20 [0] : vector<4x128xf32> to vector<128xf32>
    %c0_21 = arith.constant 0 : index
    %c1 = arith.constant 1 : index
    %c0_22 = arith.constant 0 : index
    %36 = vector.load %arg8[%c0_21, %c1, %c0_22] : memref<1x6x128xf32, #tpu.memory_space<vmem>>, vector<1x1x128xf32>
    %37 = vector.shape_cast %36 : vector<1x1x128xf32> to vector<128xf32>
    %38 = vector.shape_cast %35 : vector<128xf32> to vector<1x1x128xf32>
    tpu.vector_store %arg8[%c0_21, %c1, %c0_22], %38 {strides = array<i32>} : memref<1x6x128xf32, #tpu.memory_space<vmem>>, vector<1x1x128xf32>,
    %cst_23 = arith.constant dense<0.000000e+00> : vector<128xf32>
    %39 = vector.multi_reduction <add>, %33, %cst_23 [0] : vector<4x128xf32> to vector<128xf32>
    %c0_24 = arith.constant 0 : index
    %c1_25 = arith.constant 1 : index
    %c0_26 = arith.constant 0 : index
    %40 = vector.load %arg9[%c0_24, %c1_25, %c0_26] : memref<1x6x128xf32, #tpu.memory_space<vmem>>, vector<1x1x128xf32>
    %41 = vector.shape_cast %40 : vector<1x1x128xf32> to vector<128xf32>
    %42 = vector.shape_cast %39 : vector<128xf32> to vector<1x1x128xf32>
    tpu.vector_store %arg9[%c0_24, %c1_25, %c0_26], %42 {strides = array<i32>} : memref<1x6x128xf32, #tpu.memory_space<vmem>>, vector<1x1x128xf32>,
    %c0_27 = arith.constant 0 : index
    %c0_28 = arith.constant 0 : index
    %43 = vector.load %arg4[%c0_27, %c0_28] : memref<4x128xf32, #tpu.memory_space<vmem>>, vector<4x128xf32>
    %cst_29 = arith.constant 0.000000e+00 : f32
    %44 = vector.broadcast %cst_29 : f32 to vector<4x128xf32>
    %45 = arith.select %5, %43, %44 : vector<4x128xi1>, vector<4x128xf32>
    %46 = math.absf %45 : vector<4x128xf32>
    %cst_30 = arith.constant 0x7F800000 : f32
    %47 = vector.broadcast %cst_30 : f32 to vector<4x128xf32>
    %48 = arith.cmpf olt, %46, %47 : vector<4x128xf32>
    %cst_31 = arith.constant 0.000000e+00 : f32
    %49 = vector.broadcast %cst_31 : f32 to vector<4x128xf32>
    %50 = arith.select %48, %8, %49 : vector<4x128xi1>, vector<4x128xf32>
    %51 = arith.mulf %50, %45 : vector<4x128xf32>
    %cst_32 = arith.constant dense<0.000000e+00> : vector<128xf32>
    %52 = vector.multi_reduction <add>, %51, %cst_32 [0] : vector<4x128xf32> to vector<128xf32>
    %c0_33 = arith.constant 0 : index
    %c2 = arith.constant 2 : index
    %c0_34 = arith.constant 0 : index
    %53 = vector.load %arg8[%c0_33, %c2, %c0_34] : memref<1x6x128xf32, #tpu.memory_space<vmem>>, vector<1x1x128xf32>
    %54 = vector.shape_cast %53 : vector<1x1x128xf32> to vector<128xf32>
    %55 = vector.shape_cast %52 : vector<128xf32> to vector<1x1x128xf32>
    tpu.vector_store %arg8[%c0_33, %c2, %c0_34], %55 {strides = array<i32>} : memref<1x6x128xf32, #tpu.memory_space<vmem>>, vector<1x1x128xf32>,
    %cst_35 = arith.constant dense<0.000000e+00> : vector<128xf32>
    %56 = vector.multi_reduction <add>, %50, %cst_35 [0] : vector<4x128xf32> to vector<128xf32>
    %c0_36 = arith.constant 0 : index
    %c2_37 = arith.constant 2 : index
    %c0_38 = arith.constant 0 : index
    %57 = vector.load %arg9[%c0_36, %c2_37, %c0_38] : memref<1x6x128xf32, #tpu.memory_space<vmem>>, vector<1x1x128xf32>
    %58 = vector.shape_cast %57 : vector<1x1x128xf32> to vector<128xf32>
    %59 = vector.shape_cast %56 : vector<128xf32> to vector<1x1x128xf32>
    tpu.vector_store %arg9[%c0_36, %c2_37, %c0_38], %59 {strides = array<i32>} : memref<1x6x128xf32, #tpu.memory_space<vmem>>, vector<1x1x128xf32>,
    %c0_39 = arith.constant 0 : index
    %c0_40 = arith.constant 0 : index
    %60 = vector.load %arg5[%c0_39, %c0_40] : memref<4x128xf32, #tpu.memory_space<vmem>>, vector<4x128xf32>
    %cst_41 = arith.constant 0.000000e+00 : f32
    %61 = vector.broadcast %cst_41 : f32 to vector<4x128xf32>
    %62 = arith.select %5, %60, %61 : vector<4x128xi1>, vector<4x128xf32>
    %63 = math.absf %62 : vector<4x128xf32>
    %cst_42 = arith.constant 0x7F800000 : f32
    %64 = vector.broadcast %cst_42 : f32 to vector<4x128xf32>
    %65 = arith.cmpf olt, %63, %64 : vector<4x128xf32>
    %cst_43 = arith.constant 0.000000e+00 : f32
    %66 = vector.broadcast %cst_43 : f32 to vector<4x128xf32>
    %67 = arith.select %65, %8, %66 : vector<4x128xi1>, vector<4x128xf32>
    %68 = arith.mulf %67, %62 : vector<4x128xf32>
    %cst_44 = arith.constant dense<0.000000e+00> : vector<128xf32>
    %69 = vector.multi_reduction <add>, %68, %cst_44 [0] : vector<4x128xf32> to vector<128xf32>
    %c0_45 = arith.constant 0 : index
    %c3 = arith.constant 3 : index
    %c0_46 = arith.constant 0 : index
    %70 = vector.load %arg8[%c0_45, %c3, %c0_46] : memref<1x6x128xf32, #tpu.memory_space<vmem>>, vector<1x1x128xf32>
    %71 = vector.shape_cast %70 : vector<1x1x128xf32> to vector<128xf32>
    %72 = vector.shape_cast %69 : vector<128xf32> to vector<1x1x128xf32>
    tpu.vector_store %arg8[%c0_45, %c3, %c0_46], %72 {strides = array<i32>} : memref<1x6x128xf32, #tpu.memory_space<vmem>>, vector<1x1x128xf32>,
    %cst_47 = arith.constant dense<0.000000e+00> : vector<128xf32>
    %73 = vector.multi_reduction <add>, %67, %cst_47 [0] : vector<4x128xf32> to vector<128xf32>
    %c0_48 = arith.constant 0 : index
    %c3_49 = arith.constant 3 : index
    %c0_50 = arith.constant 0 : index
    %74 = vector.load %arg9[%c0_48, %c3_49, %c0_50] : memref<1x6x128xf32, #tpu.memory_space<vmem>>, vector<1x1x128xf32>
    %75 = vector.shape_cast %74 : vector<1x1x128xf32> to vector<128xf32>
    %76 = vector.shape_cast %73 : vector<128xf32> to vector<1x1x128xf32>
    tpu.vector_store %arg9[%c0_48, %c3_49, %c0_50], %76 {strides = array<i32>} : memref<1x6x128xf32, #tpu.memory_space<vmem>>, vector<1x1x128xf32>,
    %c0_51 = arith.constant 0 : index
    %c0_52 = arith.constant 0 : index
    %77 = vector.load %arg6[%c0_51, %c0_52] : memref<4x128xf32, #tpu.memory_space<vmem>>, vector<4x128xf32>
    %cst_53 = arith.constant 0.000000e+00 : f32
    %78 = vector.broadcast %cst_53 : f32 to vector<4x128xf32>
    %79 = arith.select %5, %77, %78 : vector<4x128xi1>, vector<4x128xf32>
    %80 = math.absf %79 : vector<4x128xf32>
    %cst_54 = arith.constant 0x7F800000 : f32
    %81 = vector.broadcast %cst_54 : f32 to vector<4x128xf32>
    %82 = arith.cmpf olt, %80, %81 : vector<4x128xf32>
    %cst_55 = arith.constant 0.000000e+00 : f32
    %83 = vector.broadcast %cst_55 : f32 to vector<4x128xf32>
    %84 = arith.select %82, %8, %83 : vector<4x128xi1>, vector<4x128xf32>
    %85 = arith.mulf %84, %79 : vector<4x128xf32>
    %cst_56 = arith.constant dense<0.000000e+00> : vector<128xf32>
    %86 = vector.multi_reduction <add>, %85, %cst_56 [0] : vector<4x128xf32> to vector<128xf32>
    %c0_57 = arith.constant 0 : index
    %c4 = arith.constant 4 : index
    %c0_58 = arith.constant 0 : index
    %87 = vector.load %arg8[%c0_57, %c4, %c0_58] : memref<1x6x128xf32, #tpu.memory_space<vmem>>, vector<1x1x128xf32>
    %88 = vector.shape_cast %87 : vector<1x1x128xf32> to vector<128xf32>
    %89 = vector.shape_cast %86 : vector<128xf32> to vector<1x1x128xf32>
    tpu.vector_store %arg8[%c0_57, %c4, %c0_58], %89 {strides = array<i32>} : memref<1x6x128xf32, #tpu.memory_space<vmem>>, vector<1x1x128xf32>,
    %cst_59 = arith.constant dense<0.000000e+00> : vector<128xf32>
    %90 = vector.multi_reduction <add>, %84, %cst_59 [0] : vector<4x128xf32> to vector<128xf32>
    %c0_60 = arith.constant 0 : index
    %c4_61 = arith.constant 4 : index
    %c0_62 = arith.constant 0 : index
    %91 = vector.load %arg9[%c0_60, %c4_61, %c0_62] : memref<1x6x128xf32, #tpu.memory_space<vmem>>, vector<1x1x128xf32>
    %92 = vector.shape_cast %91 : vector<1x1x128xf32> to vector<128xf32>
    %93 = vector.shape_cast %90 : vector<128xf32> to vector<1x1x128xf32>
    tpu.vector_store %arg9[%c0_60, %c4_61, %c0_62], %93 {strides = array<i32>} : memref<1x6x128xf32, #tpu.memory_space<vmem>>, vector<1x1x128xf32>,
    %c0_63 = arith.constant 0 : index
    %c0_64 = arith.constant 0 : index
    %94 = vector.load %arg7[%c0_63, %c0_64] : memref<4x128xf32, #tpu.memory_space<vmem>>, vector<4x128xf32>
    %cst_65 = arith.constant 0.000000e+00 : f32
    %95 = vector.broadcast %cst_65 : f32 to vector<4x128xf32>
    %96 = arith.select %5, %94, %95 : vector<4x128xi1>, vector<4x128xf32>
    %97 = math.absf %96 : vector<4x128xf32>
    %cst_66 = arith.constant 0x7F800000 : f32
    %98 = vector.broadcast %cst_66 : f32 to vector<4x128xf32>
    %99 = arith.cmpf olt, %97, %98 : vector<4x128xf32>
    %cst_67 = arith.constant 0.000000e+00 : f32
    %100 = vector.broadcast %cst_67 : f32 to vector<4x128xf32>
    %101 = arith.select %99, %8, %100 : vector<4x128xi1>, vector<4x128xf32>
    %102 = arith.mulf %101, %96 : vector<4x128xf32>
    %cst_68 = arith.constant dense<0.000000e+00> : vector<128xf32>
    %103 = vector.multi_reduction <add>, %102, %cst_68 [0] : vector<4x128xf32> to vector<128xf32>
    %c0_69 = arith.constant 0 : index
    %c5 = arith.constant 5 : index
    %c0_70 = arith.constant 0 : index
    %104 = vector.load %arg8[%c0_69, %c5, %c0_70] : memref<1x6x128xf32, #tpu.memory_space<vmem>>, vector<1x1x128xf32>
    %105 = vector.shape_cast %104 : vector<1x1x128xf32> to vector<128xf32>
    %106 = vector.shape_cast %103 : vector<128xf32> to vector<1x1x128xf32>
    tpu.vector_store %arg8[%c0_69, %c5, %c0_70], %106 {strides = array<i32>} : memref<1x6x128xf32, #tpu.memory_space<vmem>>, vector<1x1x128xf32>,
    %cst_71 = arith.constant dense<0.000000e+00> : vector<128xf32>
    %107 = vector.multi_reduction <add>, %101, %cst_71 [0] : vector<4x128xf32> to vector<128xf32>
    %c0_72 = arith.constant 0 : index
    %c5_73 = arith.constant 5 : index
    %c0_74 = arith.constant 0 : index
    %108 = vector.load %arg9[%c0_72, %c5_73, %c0_74] : memref<1x6x128xf32, #tpu.memory_space<vmem>>, vector<1x1x128xf32>
    %109 = vector.shape_cast %108 : vector<1x1x128xf32> to vector<128xf32>
    %110 = vector.shape_cast %107 : vector<128xf32> to vector<1x1x128xf32>
    tpu.vector_store %arg9[%c0_72, %c5_73, %c0_74], %110 {strides = array<i32>} : memref<1x6x128xf32, #tpu.memory_space<vmem>>, vector<1x1x128xf32>,
    return
  }
  func.func @transform_0(%arg0: i32) -> (i32, i32) {
    %c0_i32 = arith.constant 0 : i32
    %c0_i32_0 = arith.constant 0 : i32
    return %arg0, %c0_i32 : i32, i32
  }
  func.func @transform_1(%arg0: i32) -> (i32, i32) {
    %c0_i32 = arith.constant 0 : i32
    %c0_i32_0 = arith.constant 0 : i32
    return %arg0, %c0_i32 : i32, i32
  }
  func.func @transform_2(%arg0: i32) -> (i32, i32) {
    %c0_i32 = arith.constant 0 : i32
    %c0_i32_0 = arith.constant 0 : i32
    return %arg0, %c0_i32 : i32, i32
  }
  func.func @transform_3(%arg0: i32) -> (i32, i32) {
    %c0_i32 = arith.constant 0 : i32
    %c0_i32_0 = arith.constant 0 : i32
    return %arg0, %c0_i32 : i32, i32
  }
  func.func @transform_4(%arg0: i32) -> (i32, i32) {
    %c0_i32 = arith.constant 0 : i32
    %c0_i32_0 = arith.constant 0 : i32
    return %arg0, %c0_i32 : i32, i32
  }
  func.func @transform_5(%arg0: i32) -> (i32, i32) {
    %c0_i32 = arith.constant 0 : i32
    %c0_i32_0 = arith.constant 0 : i32
    return %arg0, %c0_i32 : i32, i32
  }
  func.func @transform_6(%arg0: i32) -> (i32, i32) {
    %c0_i32 = arith.constant 0 : i32
    %c0_i32_0 = arith.constant 0 : i32
    return %arg0, %c0_i32 : i32, i32
  }
  func.func @transform_7(%arg0: i32) -> (i32, i32, i32) {
    %c0_i32 = arith.constant 0 : i32
    %c0_i32_0 = arith.constant 0 : i32
    %c0_i32_1 = arith.constant 0 : i32
    return %arg0, %c0_i32, %c0_i32_0 : i32, i32, i32
  }
  func.func @transform_8(%arg0: i32) -> (i32, i32, i32) {
    %c0_i32 = arith.constant 0 : i32
    %c0_i32_0 = arith.constant 0 : i32
    %c0_i32_1 = arith.constant 0 : i32
    return %arg0, %c0_i32, %c0_i32_0 : i32, i32, i32
  }
}

</mosaic_0001>

<llo_original>
// kernel: tpu_custom_call.1
$region0: #{tpu_custom_call.1}
  #allocation0 [shape = 'u32[]', space=smem, size = 0x4, offset = 0x4, fixed_abs, tag = 'smem constant byte address 0x4 - core index']
  #allocation1 [shape = 'u32[144,128]{1,0:T(1,128)}', space=vmem, size = 0x12000, scoped, tag = 'internal scratch']
  %s0 = inlined_call_operand.hbm [shape: f32[4,128], index: 0, kind: input, shape index: {}]
  %s1 = inlined_call_operand.hbm [shape: f32[4,128], index: 1, kind: input, shape index: {}]
  %s2 = inlined_call_operand.vmem [shape: f32[4,128], index: 2, kind: input, shape index: {}]
  %s3 = inlined_call_operand.vmem [shape: f32[4,128], index: 3, kind: input, shape index: {}]
  %s4 = inlined_call_operand.vmem [shape: f32[4,128], index: 4, kind: input, shape index: {}]
  %s5 = inlined_call_operand.vmem [shape: f32[4,128], index: 5, kind: input, shape index: {}]
  %s6 = inlined_call_operand.vmem [shape: f32[4,128], index: 6, kind: input, shape index: {}]
  %s7 = inlined_call_operand.vmem [shape: f32[1,6,128], index: 7, kind: output, shape index: {0}]
  %s8 = inlined_call_operand.vmem [shape: f32[1,6,128], index: 8, kind: output, shape index: {1}]
  %9 = xla_tuple %s7, %s8
  %s10 = sld [smem:[#allocation0]]
  $region54: #{tpu_custom_call.1} parent=0
    _
  %s12 = ssub.s32 1, %s10
  %s13 = scalar_select 0, %s12, %s10
  $region1: #{tpu_custom_call.1} parent=0
    #allocation2 [shape = 'u8[2048]{0}', space=vmem, size = 0x800, scoped, tag = 'input window, operand 0, single buffered']
    #allocation3 [shape = 's32[1]{0}', space=sflag, size = 0x4, scoped, tag = 'scoped memory for tpu_custom_call.1']
    #allocation4 [shape = 'u8[2048]{0}', space=vmem, size = 0x800, scoped, tag = 'input window, operand 1, single buffered']
    #allocation5 [shape = 's32[1]{0}', space=sflag, size = 0x4, scoped, tag = 'scoped memory for tpu_custom_call.1']
    %14 = vsyncpa [#allocation3], 0
    %15 = vsyncpa [#allocation5], 0
    // Predicated region
    $region2: #{tpu_custom_call.1} parent=1 // pred_check
      _
    $region3: #{tpu_custom_call.1} parent=1 // pred_check_branch
      %17 = sbr.rel (0) target = $region5
    $region4: #{tpu_custom_call.1} parent=1 // pred_region
      %s19 = ssub.s32 64, 64
      %20 = vsyncadd [#allocation3], %s19
      %s22 = sshll.u32 [#allocation2], 4
      %s23 = int_to_ptr.vmem [resolvable:$true] %s22
      %25 = dma.hbm_to_vmem [thread:$0]  %s0, 64, %s23, [#allocation3]
    $region5: #{tpu_custom_call.1} parent=1 // pred_fallthru
      _
    // Predicated region
    $region6: #{tpu_custom_call.1} parent=1 // pred_check
      _
    $region7: #{tpu_custom_call.1} parent=1 // pred_check_branch
      %27 = sbr.rel (0) target = $region9
    $region8: #{tpu_custom_call.1} parent=1 // pred_region
      %s29 = ssub.s32 64, 64
      %30 = vsyncadd [#allocation5], %s29
      %s32 = sshll.u32 [#allocation4], 4
      %s33 = int_to_ptr.vmem [resolvable:$true] %s32
      %35 = dma.hbm_to_vmem [thread:$0]  %s1, 64, %s33, [#allocation5]
    $region9: #{tpu_custom_call.1} parent=1 // pred_fallthru
      _
    // Predicated region
    $region10: #{tpu_custom_call.1} parent=1 // pred_check
      _
    $region11: #{tpu_custom_call.1} parent=1 // pred_check_branch
      %37 = sbr.rel (0) target = $region13
    $region12: #{tpu_custom_call.1} parent=1 // pred_region
      _
    $region13: #{tpu_custom_call.1} parent=1 // pred_fallthru
      _
    // Predicated region
    $region14: #{tpu_custom_call.1} parent=1 // pred_check
      _
    $region15: #{tpu_custom_call.1} parent=1 // pred_check_branch
      %39 = sbr.rel (0) target = $region17
    $region16: #{tpu_custom_call.1} parent=1 // pred_region
      _
    $region17: #{tpu_custom_call.1} parent=1 // pred_fallthru
      _
    // Predicated region
    $region18: #{tpu_custom_call.1} parent=1 // pred_check
      _
    $region19: #{tpu_custom_call.1} parent=1 // pred_check_branch
      %41 = sbr.rel (0) target = $region21
    $region20: #{tpu_custom_call.1} parent=1 // pred_region
      _
    $region21: #{tpu_custom_call.1} parent=1 // pred_fallthru
      _
    // Predicated region
    $region22: #{tpu_custom_call.1} parent=1 // pred_check
      _
    $region23: #{tpu_custom_call.1} parent=1 // pred_check_branch
      %43 = sbr.rel (0) target = $region25
    $region24: #{tpu_custom_call.1} parent=1 // pred_region
      _
    $region25: #{tpu_custom_call.1} parent=1 // pred_fallthru
      _
    // Predicated region
    $region26: #{tpu_custom_call.1} parent=1 // pred_check
      _
    $region27: #{tpu_custom_call.1} parent=1 // pred_check_branch
      %45 = sbr.rel (0) target = $region29
    $region28: #{tpu_custom_call.1} parent=1 // pred_region
      _
    $region29: #{tpu_custom_call.1} parent=1 // pred_fallthru
      _
    // Predicated region
    $region30: #{tpu_custom_call.1} parent=1 // pred_check
      _
    $region31: #{tpu_custom_call.1} parent=1 // pred_check_branch
      %47 = sbr.rel (0) target = $region33
    $region32: #{tpu_custom_call.1} parent=1 // pred_region
      %48 = dma.done [#allocation3], 64
    $region33: #{tpu_custom_call.1} parent=1 // pred_fallthru
      _
    // Predicated region
    $region34: #{tpu_custom_call.1} parent=1 // pred_check
      _
    $region35: #{tpu_custom_call.1} parent=1 // pred_check_branch
      %50 = sbr.rel (0) target = $region37
    $region36: #{tpu_custom_call.1} parent=1 // pred_region
      %51 = dma.done [#allocation5], 64
    $region37: #{tpu_custom_call.1} parent=1 // pred_fallthru
      _
    %v52 = vlaneseq
    %v53 = vshrl.u32 %v52, 7
    %s54 = smul.u32 0, 4
    %v55 = vstv %s54
    %v56 = vadd.s32 %v55, %v53
    %vm57 = vcmp.lt.s32.totalorder %v56, 4
    %v58 = vld [vmem:[#allocation2] sm:$0xf]
    %v59 = vsel %vm57, %v58, 0.0
    %v60 = vld [vmem:[#allocation4] sm:$0xf]
    %v61 = vsel %vm57, %v60, 0.0
    %v62 = vand.u32 2147483647, %v61
    %vm63 = vcmp.lt.f32.partialorder %v62, inf
    %v64 = vsel %vm63, %v59, 0.0
    %v65 = vmul.f32 %v64, %v61
    %vm66 = vcmask 1043456
    %v67 = vsel %vm66, %v65, 0.0
    %v68 = vrot.slane %v67, 4
    %v69 = vadd.f32 %v67, %v68
    %v70 = vrot.slane %v69, 2
    %v71 = vadd.f32 %v69, %v70
    %v72 = vrot.slane %v71, 1
    %v73 = vadd.f32 %v71, %v72
    %74 = vst [vmem:[%s7] sm:$0x1] %v73
    %v75 = vsel %vm66, %v64, 0.0
    %v76 = vrot.slane %v75, 4
    %v77 = vadd.f32 %v75, %v76
    %v78 = vrot.slane %v77, 2
    %v79 = vadd.f32 %v77, %v78
    %v80 = vrot.slane %v79, 1
    %v81 = vadd.f32 %v79, %v80
    %82 = vst [vmem:[%s8] sm:$0x1] %v81
    %v83 = vld [vmem:[%s2] sm:$0xf]
    %v84 = vsel %vm57, %v83, 0.0
    %v85 = vand.u32 2147483647, %v84
    %vm86 = vcmp.lt.f32.partialorder %v85, inf
    %v87 = vsel %vm86, %v59, 0.0
    %v88 = vmul.f32 %v87, %v84
    %v89 = vsel %vm66, %v88, 0.0
    %v90 = vrot.slane %v89, 4
    %v91 = vadd.f32 %v89, %v90
    %v92 = vrot.slane %v91, 2
    %v93 = vadd.f32 %v91, %v92
    %v94 = vrot.slane %v93, 1
    %v95 = vadd.f32 %v93, %v94
    %96 = vst [vmem:[%s7 + $0x1] sm:$0x1] %v95
    %v97 = vsel %vm66, %v87, 0.0
    %v98 = vrot.slane %v97, 4
    %v99 = vadd.f32 %v97, %v98
    %v100 = vrot.slane %v99, 2
    %v101 = vadd.f32 %v99, %v100
    %v102 = vrot.slane %v101, 1
    %v103 = vadd.f32 %v101, %v102
    %104 = vst [vmem:[%s8 + $0x1] sm:$0x1] %v103
    %v105 = vld [vmem:[%s3] sm:$0xf]
    %v106 = vsel %vm57, %v105, 0.0
    %v107 = vand.u32 2147483647, %v106
    %vm108 = vcmp.lt.f32.partialorder %v107, inf
    %v109 = vsel %vm108, %v59, 0.0
    %v110 = vmul.f32 %v109, %v106
    %v111 = vsel %vm66, %v110, 0.0
    %v112 = vrot.slane %v111, 4
    %v113 = vadd.f32 %v111, %v112
    %v114 = vrot.slane %v113, 2
    %v115 = vadd.f32 %v113, %v114
    %v116 = vrot.slane %v115, 1
    %v117 = vadd.f32 %v115, %v116
    %118 = vst [vmem:[%s7 + $0x2] sm:$0x1] %v117
    %v119 = vsel %vm66, %v109, 0.0
    %v120 = vrot.slane %v119, 4
    %v121 = vadd.f32 %v119, %v120
    %v122 = vrot.slane %v121, 2
    %v123 = vadd.f32 %v121, %v122
    %v124 = vrot.slane %v123, 1
    %v125 = vadd.f32 %v123, %v124
    %126 = vst [vmem:[%s8 + $0x2] sm:$0x1] %v125
    %v127 = vld [vmem:[%s4] sm:$0xf]
    %v128 = vsel %vm57, %v127, 0.0
    %v129 = vand.u32 2147483647, %v128
    %vm130 = vcmp.lt.f32.partialorder %v129, inf
    %v131 = vsel %vm130, %v59, 0.0
    %v132 = vmul.f32 %v131, %v128
    %v133 = vsel %vm66, %v132, 0.0
    %v134 = vrot.slane %v133, 4
    %v135 = vadd.f32 %v133, %v134
    %v136 = vrot.slane %v135, 2
    %v137 = vadd.f32 %v135, %v136
    %v138 = vrot.slane %v137, 1
    %v139 = vadd.f32 %v137, %v138
    %140 = vst [vmem:[%s7 + $0x3] sm:$0x1] %v139
    %v141 = vsel %vm66, %v131, 0.0
    %v142 = vrot.slane %v141, 4
    %v143 = vadd.f32 %v141, %v142
    %v144 = vrot.slane %v143, 2
    %v145 = vadd.f32 %v143, %v144
    %v146 = vrot.slane %v145, 1
    %v147 = vadd.f32 %v145, %v146
    %148 = vst [vmem:[%s8 + $0x3] sm:$0x1] %v147
    %v149 = vld [vmem:[%s5] sm:$0xf]
    %v150 = vsel %vm57, %v149, 0.0
    %v151 = vand.u32 2147483647, %v150
    %vm152 = vcmp.lt.f32.partialorder %v151, inf
    %v153 = vsel %vm152, %v59, 0.0
    %v154 = vmul.f32 %v153, %v150
    %v155 = vsel %vm66, %v154, 0.0
    %v156 = vrot.slane %v155, 4
    %v157 = vadd.f32 %v155, %v156
    %v158 = vrot.slane %v157, 2
    %v159 = vadd.f32 %v157, %v158
    %v160 = vrot.slane %v159, 1
    %v161 = vadd.f32 %v159, %v160
    %162 = vst [vmem:[%s7 + $0x4] sm:$0x1] %v161
    %v163 = vsel %vm66, %v153, 0.0
    %v164 = vrot.slane %v163, 4
    %v165 = vadd.f32 %v163, %v164
    %v166 = vrot.slane %v165, 2
    %v167 = vadd.f32 %v165, %v166
    %v168 = vrot.slane %v167, 1
    %v169 = vadd.f32 %v167, %v168
    %170 = vst [vmem:[%s8 + $0x4] sm:$0x1] %v169
    %v171 = vld [vmem:[%s6] sm:$0xf]
    %v172 = vsel %vm57, %v171, 0.0
    %v173 = vand.u32 2147483647, %v172
    %vm174 = vcmp.lt.f32.partialorder %v173, inf
    %v175 = vsel %vm174, %v59, 0.0
    %v176 = vmul.f32 %v175, %v172
    %v177 = vsel %vm66, %v176, 0.0
    %v178 = vrot.slane %v177, 4
    %v179 = vadd.f32 %v177, %v178
    %v180 = vrot.slane %v179, 2
    %v181 = vadd.f32 %v179, %v180
    %v182 = vrot.slane %v181, 1
    %v183 = vadd.f32 %v181, %v182
    %184 = vst [vmem:[%s7 + $0x5] sm:$0x1] %v183
    %v185 = vsel %vm66, %v175, 0.0
    %v186 = vrot.slane %v185, 4
    %v187 = vadd.f32 %v185, %v186
    %v188 = vrot.slane %v187, 2
    %v189 = vadd.f32 %v187, %v188
    %v190 = vrot.slane %v189, 1
    %v191 = vadd.f32 %v189, %v190
    %192 = vst [vmem:[%s8 + $0x5] sm:$0x1] %v191
    // Predicated region
    $region38: #{tpu_custom_call.1} parent=1 // pred_check
      _
    $region39: #{tpu_custom_call.1} parent=1 // pred_check_branch
      %194 = sbr.rel (0) target = $region41
    $region40: #{tpu_custom_call.1} parent=1 // pred_region
      _
    $region41: #{tpu_custom_call.1} parent=1 // pred_fallthru
      _
    // Predicated region
    $region42: #{tpu_custom_call.1} parent=1 // pred_check
      _
    $region43: #{tpu_custom_call.1} parent=1 // pred_check_branch
      %196 = sbr.rel (0) target = $region45
    $region44: #{tpu_custom_call.1} parent=1 // pred_region
      _
    $region45: #{tpu_custom_call.1} parent=1 // pred_fallthru
      _
    // Predicated region
    $region46: #{tpu_custom_call.1} parent=1 // pred_check
      _
    $region47: #{tpu_custom_call.1} parent=1 // pred_check_branch
      %198 = sbr.rel (0) target = $region49
    $region48: #{tpu_custom_call.1} parent=1 // pred_region
      _
    $region49: #{tpu_custom_call.1} parent=1 // pred_fallthru
      _
    // Predicated region
    $region50: #{tpu_custom_call.1} parent=1 // pred_check
      _
    $region51: #{tpu_custom_call.1} parent=1 // pred_check_branch
      %200 = sbr.rel (0) target = $region53
    $region52: #{tpu_custom_call.1} parent=1 // pred_region
      _
    $region53: #{tpu_custom_call.1} parent=1 // pred_fallthru
      _
    %201 = vsyncpa [#allocation3], 1
    %202 = vsyncpa [#allocation5], 1

</llo_original>
